<compile_context>
chip_gen: v5e
topology: v5e:2x2
jax: 0.10.0
libtpu: 0.0.40
codegen_flags: <defaults>
</compile_context>

<pallas_src>
import functools

import jax
import jax.numpy as jnp
from jax.experimental import pallas as pl
from jax.experimental.pallas import tpu as pltpu

LRELU_SLOPE = 0.01   # nn.LeakyReLU() default
BN_EPS = 1e-5        # nn.BatchNorm2d default

# conv2 tap t = dh*3 + dw.  Taps with dh, dw in {1, 2} ("canonical") tile conv1's
# 14x14 output exactly once -> BN1 batch statistics come from those four taps only.
_CANONICAL_TAPS = (4, 5, 7, 8)


# ---------------------------------------------------------------------------
# Fused conv1 -> LReLU -> BN1 -> conv2 -> LReLU -> BN2 kernel (single block)
# ---------------------------------------------------------------------------
def _fused_conv_bn_kernel(pcol_ref, w1big_ref, mask_ref, w2_ref, csel_ref,
                          ktile_ref, ggq_ref, prm_ref, y2_ref, *, inv_cnt2):
    """All operands VMEM-resident.  L = N*49 conv2-output pixels padded to 128 lanes.

    pcol_ref : (82, L)  conv1 im2col patches for the 9 conv2 taps (+ ones bias row)
    w1big_ref: (36, 82) kron(I9, w1) | tiled conv1 bias
    mask_ref : (36, L)  conv2 zero-padding x lane-validity mask per (tap, chan) row
    w2_ref   : (4, 36)  conv2 weight, (c_out, tap*4 + c_in)
    csel_ref : (4, 36)  canonical-tap channel selector, pre-scaled by 1/(4*N*49)
    ktile_ref: (4, 36)  [I4 I4 ... I4]: maps a (4,1) per-channel vector to (1,36)
    ggq_ref  : (36, 36) kron(I9, ones(4,4))/4: per-tap group averaging
    prm_ref  : (4, 4)   packed per-channel params [b2 | gamma | beta | 0]
    y2_ref   : (4, L)   output: BN2(LeakyReLU(conv2(...)))  (padded lanes zeroed-ish)
    """
    f32 = jnp.float32
    b2 = prm_ref[:, 0:1]
    gamma = prm_ref[:, 1:2]
    beta = prm_ref[:, 2:3]
    mask = mask_ref[...]                                      # (36, L), 0/1

    # ---- conv1 + bias (ones column) + LeakyReLU: ONE K=82 matmul (R1) --------
    z1 = jnp.dot(w1big_ref[...], pcol_ref[...], preferred_element_type=f32)
    y1 = jnp.where(z1 >= 0.0, z1, LRELU_SLOPE * z1)           # (36, L)
    y1m = y1 * mask                                           # conv2-pad + lane-valid

    # ---- BN1 batch stats, single pass (R3) -----------------------------------
    s1 = jnp.sum(y1m, axis=1, keepdims=True)                  # (36, 1)
    q1 = jnp.sum(y1m * y1, axis=1, keepdims=True)             # (36, 1) (mask is 0/1)
    stats = jnp.dot(csel_ref[...], jnp.concatenate([s1, q1], axis=1),
                    preferred_element_type=f32)               # (4, 2) = [mean, E[x^2]]
    mean1 = stats[:, 0:1]
    var1 = stats[:, 1:2] - mean1 * mean1                      # biased variance
    scale1 = gamma * jax.lax.rsqrt(var1 + BN_EPS)             # (4, 1)
    shift1 = beta - mean1 * scale1

    # ---- BN1 folded into conv2 weights (R4) + conv2 as ONE K=36 matmul (R2) ---
    scale_row = jnp.sum(scale1 * ktile_ref[...], axis=0, keepdims=True)   # (1, 36)
    shift_row = jnp.sum(shift1 * ktile_ref[...], axis=0, keepdims=True)   # (1, 36)
    w2 = w2_ref[...]
    w2_scaled = w2 * scale_row                                            # (4, 36)
    w2_shift = jnp.dot(w2 * shift_row, ggq_ref[...],
                       preferred_element_type=f32)                        # (4, 36)
    z2 = (jnp.dot(w2_scaled, y1m, preferred_element_type=f32)
          + jnp.dot(w2_shift, mask, preferred_element_type=f32)
          + b2)                                                           # (4, L)
    a2 = jnp.where(z2 >= 0.0, z2, LRELU_SLOPE * z2)

    # ---- BN2 (module reuses the same gamma/beta), single-pass stats (R3) -----
    valid = mask[16:17, :]        # canonical-tap row == pure lane-validity mask
    a2 = a2 * valid               # zero padded lanes so stats stay exact
    mean2 = jnp.sum(a2, axis=1, keepdims=True) * inv_cnt2                 # (4, 1)
    ex2 = jnp.sum(a2 * a2, axis=1, keepdims=True) * inv_cnt2
    var2 = ex2 - mean2 * mean2
    scale2 = gamma * jax.lax.rsqrt(var2 + BN_EPS)
    y2_ref[...] = a2 * scale2 + (beta - mean2 * scale2)


# ---------------------------------------------------------------------------
# Wrapper: operand preparation + pallas_call + fc epilogue
# ---------------------------------------------------------------------------
def net_arch_forward(x_nchw, params, *, matmul_dtype=jnp.float32):
    """x_nchw: (N, 1, 28, 28) float32 -> logits (N, 10) (training-mode BatchNorm)."""
    f32 = jnp.float32
    N = x_nchw.shape[0]
    mq = N * 49                                   # conv2 output pixels
    L = ((mq + 127) // 128) * 128                 # lane-padded (full 128-lane vregs)

    # ---- conv1 im2col for all 9 conv2 taps: one index-table gather (R6) -------
    # Row r = (dh*3+dw)*9 + (kh*3+kw); column m = n*49 + i*7 + j reads
    # x[n, 4i+2dh+kh-3, 4j+2dw+kw-3] (zeros outside the image = conv1/conv2 pad).
    xpad = jnp.pad(x_nchw[:, 0].astype(f32), ((0, 0), (3, 3), (3, 3)))   # (N,34,34)
    dh, dw, kh, kw = [a.reshape(-1) for a in
                      jnp.meshgrid(*([jnp.arange(3)] * 4), indexing="ij")]
    rows = 4 * jnp.arange(7)[None, :] + (2 * dh + kh)[:, None]           # (81, 7)
    cols = 4 * jnp.arange(7)[None, :] + (2 * dw + kw)[:, None]           # (81, 7)
    flat_idx = (rows[:, :, None] * 34 + cols[:, None, :]).reshape(-1)    # (81*49,)
    pcol = jnp.take(xpad.reshape(N, 34 * 34), flat_idx, axis=1)          # (N, 3969)
    pcol = pcol.reshape(N, 81, 49).transpose(1, 0, 2).reshape(81, mq)
    pcol = jnp.concatenate([pcol, jnp.ones((1, mq), f32)], axis=0)       # bias row
    pcol = jnp.pad(pcol, ((0, 0), (0, L - mq))).astype(matmul_dtype)     # (82, L)

    # ---- folded weights / constant bookkeeping (all static shapes) ------------
    w1r = params["w1"].reshape(4, 9)
    w1big = jnp.concatenate(
        [jnp.kron(jnp.eye(9, dtype=f32), w1r),
         jnp.tile(params["b1"].reshape(4, 1), (9, 1))], axis=1
    ).astype(matmul_dtype)                                               # (36, 82)
    w2row = jnp.transpose(params["w2"], (0, 2, 3, 1)).reshape(4, 36)     # (4, 36)

    lane = jnp.arange(L)
    valid = lane < mq
    i_idx = (lane % 49) // 7
    j_idx = lane % 7
    mask_rows = []
    for dh_ in range(3):
        for dw_ in range(3):
            m = valid
            if dh_ == 0:
                m = m & (i_idx > 0)      # conv2 zero padding at output row i == 0
            if dw_ == 0:
                m = m & (j_idx > 0)      # conv2 zero padding at output col j == 0
            mask_rows.append(m)
    mask9 = jnp.stack(mask_rows, axis=0).astype(f32)                     # (9, L)
    mask36 = jnp.repeat(mask9, 4, axis=0)                                # (36, L)

    csel = jnp.zeros((4, 36), f32)
    for t in _CANONICAL_TAPS:
        csel = csel.at[:, t * 4:(t + 1) * 4].add(jnp.eye(4, dtype=f32))
    csel = csel / (4.0 * mq)                                             # folds 1/count
    ktile = jnp.tile(jnp.eye(4, dtype=f32), (1, 9))                      # (4, 36)
    ggq = jnp.kron(jnp.eye(9, dtype=f32), jnp.full((4, 4), 0.25, f32))   # (36, 36)
    chprm = jnp.stack([params["b2"], params["bn_g"], params["bn_b"],
                       jnp.zeros((4,), f32)], axis=1)                    # (4, 4)

    vmem = pl.BlockSpec(memory_space=pltpu.MemorySpace.VMEM)
    y2 = pl.pallas_call(
        functools.partial(_fused_conv_bn_kernel, inv_cnt2=1.0 / mq),
        out_shape=jax.ShapeDtypeStruct((4, L), f32),
        in_specs=[vmem] * 8,
        out_specs=vmem,
    )(pcol, w1big, mask36, w2row, csel, ktile, ggq, chprm)

    # ---- flatten (channel-major, as torch.flatten on NCHW) + fc (R5) ----------
    # Exactly fcw(10,196) @ y2(196,N): no replicated weight, no O(N^2) selector.
    y2 = y2[:, :mq].reshape(4, N, 49)
    logits = jnp.einsum("ocp,cnp->no", params["fcw"].reshape(10, 4, 49), y2)
    return logits + params["fcb"][None, :]


# ---------------------------------------------------------------------------
# Deterministic parameter init (shapes from Net_arch.__init__, PyTorch-style)
# ---------------------------------------------------------------------------
def init_params(key):
    ks = jax.random.split(key, 6)

    def unif(k, shape, fan_in):
        bound = 1.0 / jnp.sqrt(float(fan_in))
        return jax.random.uniform(k, shape, jnp.float32, -bound, bound)

    return {
        "w1": unif(ks[0], (4, 1, 3, 3), 9),       # Conv2d(1, 4, 3, 2, 1)
        "b1": unif(ks[1], (4,), 9),
        "w2": unif(ks[2], (4, 4, 3, 3), 36),      # Conv2d(4, 4, 3, 2, 1)
        "b2": unif(ks[3], (4,), 36),
        "bn_g": jnp.ones((4,), jnp.float32),      # BatchNorm2d(4) default affine
        "bn_b": jnp.zeros((4,), jnp.float32),
        "fcw": unif(ks[4], (10, 196), 196),       # Linear(7*7*4, 10)
        "fcb": unif(ks[5], (10,), 196),
    }
    # TODO(synk): BatchNorm running_mean/running_var momentum updates are
    # training-time side effects that do not affect this forward output.


if __name__ == "__main__":
    key = jax.random.PRNGKey(0)
    kx, kp = jax.random.split(key)
    x = jax.random.normal(kx, (2, 1, 28, 28), jnp.float32)   # batch=2, 28x28
    params = init_params(kp)

    out = jax.jit(net_arch_forward)(x, params)
    jax.block_until_ready(out)
    assert out.shape == (2, 10) and out.dtype == jnp.float32
    print("KERNEL_OK")
</pallas_src>

<mosaic_0001>
module attributes {stable_mosaic.version = 11 : i64} {
  func.func @_fused_conv_bn_kernel(%arg0: memref<82x128xf32, #tpu.memory_space<vmem>>, %arg1: memref<36x82xf32, #tpu.memory_space<vmem>>, %arg2: memref<36x128xf32, #tpu.memory_space<vmem>>, %arg3: memref<4x36xf32, #tpu.memory_space<vmem>>, %arg4: memref<4x36xf32, #tpu.memory_space<vmem>>, %arg5: memref<4x36xf32, #tpu.memory_space<vmem>>, %arg6: memref<36x36xf32, #tpu.memory_space<vmem>>, %arg7: memref<4x4xf32, #tpu.memory_space<vmem>>, %arg8: memref<4x128xf32, #tpu.memory_space<vmem>>) attributes {dimension_semantics = [], scalar_prefetch = 0 : i64, scratch_operands = 0 : i64, tpu.core_type = #tpu.core_type<tc>} {
    %c0 = arith.constant 0 : index
    %c0_0 = arith.constant 0 : index
    %0 = vector.load %arg7[%c0, %c0_0] : memref<4x4xf32, #tpu.memory_space<vmem>>, vector<4x1xf32>
    %c0_1 = arith.constant 0 : index
    %c1 = arith.constant 1 : index
    %1 = vector.load %arg7[%c0_1, %c1] : memref<4x4xf32, #tpu.memory_space<vmem>>, vector<4x1xf32>
    %c0_2 = arith.constant 0 : index
    %c2 = arith.constant 2 : index
    %2 = vector.load %arg7[%c0_2, %c2] : memref<4x4xf32, #tpu.memory_space<vmem>>, vector<4x1xf32>
    %c0_3 = arith.constant 0 : index
    %c0_4 = arith.constant 0 : index
    %3 = vector.load %arg2[%c0_3, %c0_4] : memref<36x128xf32, #tpu.memory_space<vmem>>, vector<36x128xf32>
    %c0_5 = arith.constant 0 : index
    %c0_6 = arith.constant 0 : index
    %4 = vector.load %arg1[%c0_5, %c0_6] : memref<36x82xf32, #tpu.memory_space<vmem>>, vector<36x82xf32>
    %c0_7 = arith.constant 0 : index
    %c0_8 = arith.constant 0 : index
    %5 = vector.load %arg0[%c0_7, %c0_8] : memref<82x128xf32, #tpu.memory_space<vmem>>, vector<82x128xf32>
    %cst = arith.constant dense<0.000000e+00> : vector<36x128xf32>
    %6 = tpu.matmul %4, %5, %cst {dimension_numbers = #tpu.dot_dimension_numbers<[1], [0], [0], [1], [0, 0, 1, 1], [], []>} : vector<36x82xf32>, vector<82x128xf32>, vector<36x128xf32> -> vector<36x128xf32>
    %cst_9 = arith.constant 0.000000e+00 : f32
    %7 = vector.broadcast %cst_9 : f32 to vector<36x128xf32>
    %8 = arith.cmpf oge, %6, %7 : vector<36x128xf32>
    %cst_10 = arith.constant 0.00999999977 : f32
    %9 = vector.broadcast %cst_10 : f32 to vector<36x128xf32>
    %10 = arith.mulf %9, %6 : vector<36x128xf32>
    %11 = arith.select %8, %6, %10 : vector<36x128xi1>, vector<36x128xf32>
    %12 = arith.mulf %11, %3 : vector<36x128xf32>
    %cst_11 = arith.constant dense<0.000000e+00> : vector<36xf32>
    %13 = vector.multi_reduction <add>, %12, %cst_11 [1] : vector<36x128xf32> to vector<36xf32>
    %14 = vector.shape_cast %13 : vector<36xf32> to vector<36x1xf32>
    %15 = arith.mulf %12, %11 : vector<36x128xf32>
    %cst_12 = arith.constant dense<0.000000e+00> : vector<36xf32>
    %16 = vector.multi_reduction <add>, %15, %cst_12 [1] : vector<36x128xf32> to vector<36xf32>
    %17 = vector.shape_cast %16 : vector<36xf32> to vector<36x1xf32>
    %c0_13 = arith.constant 0 : index
    %c0_14 = arith.constant 0 : index
    %18 = vector.load %arg4[%c0_13, %c0_14] : memref<4x36xf32, #tpu.memory_space<vmem>>, vector<4x36xf32>
    %19 = tpu.concatenate %14, %17 in 1 : vector<36x1xf32>, vector<36x1xf32> -> vector<36x2xf32>
    %cst_15 = arith.constant dense<0.000000e+00> : vector<4x2xf32>
    %20 = tpu.matmul %18, %19, %cst_15 {dimension_numbers = #tpu.dot_dimension_numbers<[1], [0], [0], [1], [0, 0, 1, 1], [], []>} : vector<4x36xf32>, vector<36x2xf32>, vector<4x2xf32> -> vector<4x2xf32>
    %21 = vector.extract_strided_slice %20 {offsets = [0, 0], sizes = [4, 1], strides = [1, 1]} : vector<4x2xf32> to vector<4x1xf32>
    %22 = vector.extract_strided_slice %20 {offsets = [0, 1], sizes = [4, 1], strides = [1, 1]} : vector<4x2xf32> to vector<4x1xf32>
    %23 = arith.mulf %21, %21 : vector<4x1xf32>
    %24 = arith.subf %22, %23 : vector<4x1xf32>
    %cst_16 = arith.constant 9.99999974E-6 : f32
    %25 = vector.broadcast %cst_16 : f32 to vector<4x1xf32>
    %26 = arith.addf %24, %25 : vector<4x1xf32>
    %27 = math.rsqrt %26 : vector<4x1xf32>
    %28 = arith.mulf %1, %27 : vector<4x1xf32>
    %29 = arith.mulf %21, %28 : vector<4x1xf32>
    %30 = arith.subf %2, %29 : vector<4x1xf32>
    %c0_17 = arith.constant 0 : index
    %c0_18 = arith.constant 0 : index
    %31 = vector.load %arg5[%c0_17, %c0_18] : memref<4x36xf32, #tpu.memory_space<vmem>>, vector<4x36xf32>
    %32 = vector.broadcast %28 : vector<4x1xf32> to vector<4x36xf32>
    %33 = arith.mulf %32, %31 : vector<4x36xf32>
    %cst_19 = arith.constant dense<0.000000e+00> : vector<36xf32>
    %34 = vector.multi_reduction <add>, %33, %cst_19 [0] : vector<4x36xf32> to vector<36xf32>
    %35 = vector.shape_cast %34 : vector<36xf32> to vector<1x36xf32>
    %c0_20 = arith.constant 0 : index
    %c0_21 = arith.constant 0 : index
    %36 = vector.load %arg5[%c0_20, %c0_21] : memref<4x36xf32, #tpu.memory_space<vmem>>, vector<4x36xf32>
    %37 = vector.broadcast %30 : vector<4x1xf32> to vector<4x36xf32>
    %38 = arith.mulf %37, %36 : vector<4x36xf32>
    %cst_22 = arith.constant dense<0.000000e+00> : vector<36xf32>
    %39 = vector.multi_reduction <add>, %38, %cst_22 [0] : vector<4x36xf32> to vector<36xf32>
    %40 = vector.shape_cast %39 : vector<36xf32> to vector<1x36xf32>
    %c0_23 = arith.constant 0 : index
    %c0_24 = arith.constant 0 : index
    %41 = vector.load %arg3[%c0_23, %c0_24] : memref<4x36xf32, #tpu.memory_space<vmem>>, vector<4x36xf32>
    %42 = vector.broadcast %35 : vector<1x36xf32> to vector<4x36xf32>
    %43 = arith.mulf %41, %42 : vector<4x36xf32>
    %44 = vector.broadcast %40 : vector<1x36xf32> to vector<4x36xf32>
    %45 = arith.mulf %41, %44 : vector<4x36xf32>
    %c0_25 = arith.constant 0 : index
    %c0_26 = arith.constant 0 : index
    %46 = vector.load %arg6[%c0_25, %c0_26] : memref<36x36xf32, #tpu.memory_space<vmem>>, vector<36x36xf32>
    %cst_27 = arith.constant dense<0.000000e+00> : vector<4x36xf32>
    %47 = tpu.matmul %45, %46, %cst_27 {dimension_numbers = #tpu.dot_dimension_numbers<[1], [0], [0], [1], [0, 0, 1, 1], [], []>} : vector<4x36xf32>, vector<36x36xf32>, vector<4x36xf32> -> vector<4x36xf32>
    %cst_28 = arith.constant dense<0.000000e+00> : vector<4x128xf32>
    %48 = tpu.matmul %43, %12, %cst_28 {dimension_numbers = #tpu.dot_dimension_numbers<[1], [0], [0], [1], [0, 0, 1, 1], [], []>} : vector<4x36xf32>, vector<36x128xf32>, vector<4x128xf32> -> vector<4x128xf32>
    %cst_29 = arith.constant dense<0.000000e+00> : vector<4x128xf32>
    %49 = tpu.matmul %47, %3, %cst_29 {dimension_numbers = #tpu.dot_dimension_numbers<[1], [0], [0], [1], [0, 0, 1, 1], [], []>} : vector<4x36xf32>, vector<36x128xf32>, vector<4x128xf32> -> vector<4x128xf32>
    %50 = arith.addf %48, %49 : vector<4x128xf32>
    %51 = vector.broadcast %0 : vector<4x1xf32> to vector<4x128xf32>
    %52 = arith.addf %50, %51 : vector<4x128xf32>
    %cst_30 = arith.constant 0.000000e+00 : f32
    %53 = vector.broadcast %cst_30 : f32 to vector<4x128xf32>
    %54 = arith.cmpf oge, %52, %53 : vector<4x128xf32>
    %cst_31 = arith.constant 0.00999999977 : f32
    %55 = vector.broadcast %cst_31 : f32 to vector<4x128xf32>
    %56 = arith.mulf %55, %52 : vector<4x128xf32>
    %57 = arith.select %54, %52, %56 : vector<4x128xi1>, vector<4x128xf32>
    %58 = vector.extract_strided_slice %3 {offsets = [16, 0], sizes = [1, 128], strides = [1, 1]} : vector<36x128xf32> to vector<1x128xf32>
    %59 = vector.broadcast %58 : vector<1x128xf32> to vector<4x128xf32>
    %60 = arith.mulf %57, %59 : vector<4x128xf32>
    %cst_32 = arith.constant dense<0.000000e+00> : vector<4xf32>
    %61 = vector.multi_reduction <add>, %60, %cst_32 [1] : vector<4x128xf32> to vector<4xf32>
    %62 = vector.shape_cast %61 : vector<4xf32> to vector<4x1xf32>
    %cst_33 = arith.constant 0.0102040814 : f32
    %63 = vector.broadcast %cst_33 : f32 to vector<4x1xf32>
    %64 = arith.mulf %62, %63 : vector<4x1xf32>
    %65 = arith.mulf %60, %60 : vector<4x128xf32>
    %cst_34 = arith.constant dense<0.000000e+00> : vector<4xf32>
    %66 = vector.multi_reduction <add>, %65, %cst_34 [1] : vector<4x128xf32> to vector<4xf32>
    %67 = vector.shape_cast %66 : vector<4xf32> to vector<4x1xf32>
    %cst_35 = arith.constant 0.0102040814 : f32
    %68 = vector.broadcast %cst_35 : f32 to vector<4x1xf32>
    %69 = arith.mulf %67, %68 : vector<4x1xf32>
    %70 = arith.mulf %64, %64 : vector<4x1xf32>
    %71 = arith.subf %69, %70 : vector<4x1xf32>
    %cst_36 = arith.constant 9.99999974E-6 : f32
    %72 = vector.broadcast %cst_36 : f32 to vector<4x1xf32>
    %73 = arith.addf %71, %72 : vector<4x1xf32>
    %74 = math.rsqrt %73 : vector<4x1xf32>
    %75 = arith.mulf %1, %74 : vector<4x1xf32>
    %76 = vector.broadcast %75 : vector<4x1xf32> to vector<4x128xf32>
    %77 = arith.mulf %60, %76 : vector<4x128xf32>
    %78 = arith.mulf %64, %75 : vector<4x1xf32>
    %79 = arith.subf %2, %78 : vector<4x1xf32>
    %80 = vector.broadcast %79 : vector<4x1xf32> to vector<4x128xf32>
    %81 = arith.addf %77, %80 : vector<4x128xf32>
    %c0_37 = arith.constant 0 : index
    %c0_38 = arith.constant 0 : index
    %82 = vector.load %arg8[%c0_37, %c0_38] : memref<4x128xf32, #tpu.memory_space<vmem>>, vector<4x128xf32>
    tpu.vector_store %arg8[%c0_37, %c0_38], %81 {strides = array<i32>} : memref<4x128xf32, #tpu.memory_space<vmem>>, vector<4x128xf32>,
    return
  }
}

</mosaic_0001>

<llo_original>
// kernel: tile.17
$region0: #{tile.17}
  %s0 = inlined_call_operand.vmem [shape: f32[4,9,4], index: 0, kind: input, shape index: {}]
  %s1 = inlined_call_operand.vmem [shape: f32[4,36], index: 1, kind: output, shape index: {}]
  $region1: #{tile.17} parent=0
    #allocation0 [shape = 'u8[4096]{0}', space=vmem, size = 0x1000, scoped, tag = 'scoped mem for output reshape']
    %s2 = smov 3
    %v3 = vld [vmem:[%s0] ss:$16 sm:%s2]
    %s4 = smov 12
    %v5 = vld [vmem:[%s0] ss:$16 sm:%s4]
    %vm6 = vcmask 1043458
    %v7 = vsel %vm6, %v5, %v3
    %vm8 = vcmask 31744
    %9 = vst.msk [vmem:[#allocation0] sm:$0xf] %vm8, %v7
    %s10 = scalar_lea.vmem %s0, 8
    %s11 = smov 3
    %v12 = vld [vmem:[%s10] ss:$16 sm:%s11]
    %s13 = scalar_lea.vmem %s0, 8
    %s14 = smov 12
    %v15 = vld [vmem:[%s13] ss:$16 sm:%s14]
    %vm16 = vcmask 1043458
    %v17 = vsel %vm16, %v15, %v12
    %18 = vrot.lane.b32.xlu0 %v17, 32
    %v19 = vpop.permute.xlu0 %18
    %vm20 = vcmask 294144
    %21 = vst.msk [vmem:[#allocation0] sm:$0xf] %vm20, %v19
    %s22 = scalar_lea.vmem %s0, 7
    %s23 = smov 3
    %v24 = vld [vmem:[%s22] ss:$16 sm:%s23]
    %s25 = scalar_lea.vmem %s0, 7
    %s26 = smov 12
    %v27 = vld [vmem:[%s25] ss:$16 sm:%s26]
    %vm28 = vcmask 1043458
    %v29 = vsel %vm28, %v27, %v24
    %30 = vrot.lane.b32.xlu0 %v29, 28
    %v31 = vpop.permute.xlu0 %30
    %vm32 = vcmask 261344
    %33 = vst.msk [vmem:[#allocation0] sm:$0xf] %vm32, %v31
    %s34 = scalar_lea.vmem %s0, 6
    %s35 = smov 3
    %v36 = vld [vmem:[%s34] ss:$16 sm:%s35]
    %s37 = scalar_lea.vmem %s0, 6
    %s38 = smov 12
    %v39 = vld [vmem:[%s37] ss:$16 sm:%s38]
    %vm40 = vcmask 1043458
    %v41 = vsel %vm40, %v39, %v36
    %42 = vrot.lane.b32.xlu0 %v41, 24
    %v43 = vpop.permute.xlu0 %42
    %vm44 = vcmask 228544
    %45 = vst.msk [vmem:[#allocation0] sm:$0xf] %vm44, %v43
    %s46 = scalar_lea.vmem %s0, 5
    %s47 = smov 3
    %v48 = vld [vmem:[%s46] ss:$16 sm:%s47]
    %s49 = scalar_lea.vmem %s0, 5
    %s50 = smov 12
    %v51 = vld [vmem:[%s49] ss:$16 sm:%s50]
    %vm52 = vcmask 1043458
    %v53 = vsel %vm52, %v51, %v48
    %54 = vrot.lane.b32.xlu0 %v53, 20
    %v55 = vpop.permute.xlu0 %54
    %vm56 = vcmask 195744
    %57 = vst.msk [vmem:[#allocation0] sm:$0xf] %vm56, %v55
    %s58 = scalar_lea.vmem %s0, 4
    %s59 = smov 3
    %v60 = vld [vmem:[%s58] ss:$16 sm:%s59]
    %s61 = scalar_lea.vmem %s0, 4
    %s62 = smov 12
    %v63 = vld [vmem:[%s61] ss:$16 sm:%s62]
    %vm64 = vcmask 1043458
    %v65 = vsel %vm64, %v63, %v60
    %66 = vrot.lane.b32.xlu0 %v65, 16
    %v67 = vpop.permute.xlu0 %66
    %vm68 = vcmask 162944
    %69 = vst.msk [vmem:[#allocation0] sm:$0xf] %vm68, %v67
    %s70 = scalar_lea.vmem %s0, 3
    %s71 = smov 3
    %v72 = vld [vmem:[%s70] ss:$16 sm:%s71]
    %s73 = scalar_lea.vmem %s0, 3
    %s74 = smov 12
    %v75 = vld [vmem:[%s73] ss:$16 sm:%s74]
    %vm76 = vcmask 1043458
    %v77 = vsel %vm76, %v75, %v72
    %78 = vrot.lane.b32.xlu0 %v77, 12
    %v79 = vpop.permute.xlu0 %78
    %vm80 = vcmask 130144
    %81 = vst.msk [vmem:[#allocation0] sm:$0xf] %vm80, %v79
    %s82 = scalar_lea.vmem %s0, 2
    %s83 = smov 3
    %v84 = vld [vmem:[%s82] ss:$16 sm:%s83]
    %s85 = scalar_lea.vmem %s0, 2
    %s86 = smov 12
    %v87 = vld [vmem:[%s85] ss:$16 sm:%s86]
    %vm88 = vcmask 1043458
    %v89 = vsel %vm88, %v87, %v84
    %90 = vrot.lane.b32.xlu0 %v89, 8
    %v91 = vpop.permute.xlu0 %90
    %vm92 = vcmask 97344
    %93 = vst.msk [vmem:[#allocation0] sm:$0xf] %vm92, %v91
    %s94 = scalar_lea.vmem %s0, 1
    %s95 = smov 3
    %v96 = vld [vmem:[%s94] ss:$16 sm:%s95]
    %s97 = scalar_lea.vmem %s0, 1
    %s98 = smov 12
    %v99 = vld [vmem:[%s97] ss:$16 sm:%s98]
    %vm100 = vcmask 1043458
    %v101 = vsel %vm100, %v99, %v96
    %102 = vrot.lane.b32.xlu0 %v101, 4
    %v103 = vpop.permute.xlu0 %102
    %vm104 = vcmask 64544
    %105 = vst.msk [vmem:[#allocation0] sm:$0xf] %vm104, %v103
    %s107 = ssub.s32 16, 1
    %v108 = vld [vmem:[#allocation0] sm:%s107]
    %s110 = ssub.s32 16, 1
    %111 = vst [vmem:[%s1] sm:%s110] %v108

// kernel: net_arch_forward.1
$region0: #{net_arch_forward.1}
  #allocation0 [shape = 'u32[]', space=smem, size = 0x4, offset = 0x4, fixed_abs, tag = 'smem constant byte address 0x4 - core index']
  #allocation1 [shape = 'u32[72,128]{1,0:T(1,128)}', space=vmem, size = 0x9000, scoped, tag = 'internal scratch']
  %s0 = inlined_call_operand.vmem [shape: f32[82,128], index: 0, kind: input, shape index: {}]
  %s1 = inlined_call_operand.vmem [shape: f32[36,82], index: 1, kind: input, shape index: {}]
  %s2 = inlined_call_operand.vmem [shape: f32[36,128], index: 2, kind: input, shape index: {}]
  %s3 = inlined_call_operand.vmem [shape: f32[4,36], index: 3, kind: input, shape index: {}]
  %s4 = inlined_call_operand.vmem [shape: f32[4,36], index: 4, kind: input, shape index: {}]
  %s5 = inlined_call_operand.vmem [shape: f32[4,36], index: 5, kind: input, shape index: {}]
  %s6 = inlined_call_operand.vmem [shape: f32[36,36], index: 6, kind: input, shape index: {}]
  %s7 = inlined_call_operand.vmem [shape: f32[4,4], index: 7, kind: input, shape index: {}]
  %s8 = inlined_call_operand.vmem [shape: f32[4,128], index: 8, kind: output, shape index: {}]
  %s9 = sld [smem:[#allocation0]]
  $region42: #{net_arch_forward.1} parent=0
    _
  %s11 = ssub.s32 1, %s9
  %s12 = scalar_select 0, %s11, %s9
  // Predicated region
  $region2: #{net_arch_forward.1} parent=0 // pred_check
    _
  $region3: #{net_arch_forward.1} parent=0 // pred_check_branch
    %14 = sbr.rel (0) target = $region5
  $region4: #{net_arch_forward.1} parent=0 // pred_region
    _
  $region5: #{net_arch_forward.1} parent=0 // pred_fallthru
    _
  // Predicated region
  $region6: #{net_arch_forward.1} parent=0 // pred_check
    _
  $region7: #{net_arch_forward.1} parent=0 // pred_check_branch
    %16 = sbr.rel (0) target = $region9
  $region8: #{net_arch_forward.1} parent=0 // pred_region
    _
  $region9: #{net_arch_forward.1} parent=0 // pred_fallthru
    _
  // Predicated region
  $region10: #{net_arch_forward.1} parent=0 // pred_check
    _
  $region11: #{net_arch_forward.1} parent=0 // pred_check_branch
    %18 = sbr.rel (0) target = $region13
  $region12: #{net_arch_forward.1} parent=0 // pred_region
    _
  $region13: #{net_arch_forward.1} parent=0 // pred_fallthru
    _
  // Predicated region
  $region14: #{net_arch_forward.1} parent=0 // pred_check
    _
  $region15: #{net_arch_forward.1} parent=0 // pred_check_branch
    %20 = sbr.rel (0) target = $region17
  $region16: #{net_arch_forward.1} parent=0 // pred_region
    _
  $region17: #{net_arch_forward.1} parent=0 // pred_fallthru
    _
  // Predicated region
  $region18: #{net_arch_forward.1} parent=0 // pred_check
    _
  $region19: #{net_arch_forward.1} parent=0 // pred_check_branch
    %22 = sbr.rel (0) target = $region21
  $region20: #{net_arch_forward.1} parent=0 // pred_region
    _
  $region21: #{net_arch_forward.1} parent=0 // pred_fallthru
    _
  // Predicated region
  $region22: #{net_arch_forward.1} parent=0 // pred_check
    _
  $region23: #{net_arch_forward.1} parent=0 // pred_check_branch
    %24 = sbr.rel (0) target = $region25
  $region24: #{net_arch_forward.1} parent=0 // pred_region
    _
  $region25: #{net_arch_forward.1} parent=0 // pred_fallthru
    _
  // Predicated region
  $region26: #{net_arch_forward.1} parent=0 // pred_check
    _
  $region27: #{net_arch_forward.1} parent=0 // pred_check_branch
    %26 = sbr.rel (0) target = $region29
  $region28: #{net_arch_forward.1} parent=0 // pred_region
    _
  $region29: #{net_arch_forward.1} parent=0 // pred_fallthru
    _
  // Predicated region
  $region30: #{net_arch_forward.1} parent=0 // pred_check
    _
  $region31: #{net_arch_forward.1} parent=0 // pred_check_branch
    %28 = sbr.rel (0) target = $region33
  $region32: #{net_arch_forward.1} parent=0 // pred_region
    _
  $region33: #{net_arch_forward.1} parent=0 // pred_fallthru
    _
  %v29 = vld [vmem:[%s7] sm:$0xf]
  %v30 = vld [vmem:[%s2] sm:$0xff]
  %v31 = vld [vmem:[%s2 + $0x8] sm:$0xff]
  %v32 = vld [vmem:[%s2 + $0x10] sm:$0xff]
  %v33 = vld [vmem:[%s2 + $0x18] sm:$0xff]
  %v34 = vld [vmem:[%s2 + $0x20] sm:$0xf]
  %v35 = vld [vmem:[%s1] sm:$0xff]
  %v36 = vld [vmem:[%s1 + $0x8] sm:$0xff]
  %v37 = vld [vmem:[%s1 + $0x10] sm:$0xff]
  %v38 = vld [vmem:[%s1 + $0x18] sm:$0xff]
  %v39 = vld [vmem:[%s1 + $0x20] sm:$0xf]
  %v40 = vld [vmem:[%s0] sm:$0xff]
  %v41 = vld [vmem:[%s0 + $0x8] sm:$0xff]
  %v42 = vld [vmem:[%s0 + $0x10] sm:$0xff]
  %v43 = vld [vmem:[%s0 + $0x18] sm:$0xff]
  %v44 = vld [vmem:[%s0 + $0x20] sm:$0xff]
  %v45 = vld [vmem:[%s0 + $0x28] sm:$0xff]
  %v46 = vld [vmem:[%s0 + $0x30] sm:$0xff]
  %v47 = vld [vmem:[%s0 + $0x38] sm:$0xff]
  %v48 = vld [vmem:[%s0 + $0x40] sm:$0xff]
  %v49 = vld [vmem:[%s0 + $0x48] sm:$0xff]
  %v50 = vld [vmem:[%s0 + $0x50] sm:$0x3]
  %vm51 = vcmask 670720
  %v53 = vsel %vm51, %v35, 0
  %v56 = vsel %vm51, %v36, 0
  %v59 = vsel %vm51, %v37, 0
  %v62 = vsel %vm51, %v38, 0
  %v65 = vsel %vm51, %v39, 0
  %vm67 = vcmask 1041408
  %v69 = vsel %vm67, %v50, 0
  %71 = vmatpush.msra.mxu0 0.0
  %72 = vmatpush.msra.mxu0 0.0
  %73 = vmatpush.msra.mxu0 0.0
  %74 = vmatpush.msra.mxu0 0.0
  %75 = vmatpush.msra.mxu0 0.0
  %76 = vmatpush.msra.mxu0 %v69
  %77 = vmatpush.msra.mxu0 %v49
  %78 = vmatpush.msra.mxu0 %v48
  %79 = vmatpush.msra.mxu0 %v47
  %80 = vmatpush.msra.mxu0 %v46
  %81 = vmatpush.msra.mxu0 %v45
  %82 = vmatpush.msra.mxu0 %v44
  %83 = vmatpush.msra.mxu0 %v43
  %84 = vmatpush.msra.mxu0 %v42
  %85 = vmatpush.msra.mxu0 %v41
  %86 = vmatpush.msra.mxu0 %v40
  %87 = vmatmul.f32.gmra.mxu0 %v53
  %v88 = vpop.f32.mrf.mxu0
  %v89 = vadd.f32 0.0, %v88
  %90 = vmatmul.f32.gmra.mxu0 %v56
  %v91 = vpop.f32.mrf.mxu0
  %v92 = vadd.f32 0.0, %v91
  %93 = vmatmul.f32.gmra.mxu0 %v59
  %v94 = vpop.f32.mrf.mxu0
  %v95 = vadd.f32 0.0, %v94
  %96 = vmatmul.f32.gmra.mxu0 %v62
  %v97 = vpop.f32.mrf.mxu0
  %v98 = vadd.f32 0.0, %v97
  %99 = vmatmul.f32.gmra.mxu0 %v65
  %v100 = vpop.f32.mrf.mxu0
  %v101 = vadd.f32 0.0, %v100
  %102 = vdwg.mxu0
  %vm103 = vcmp.ge.f32.partialorder %v89, 0.0
  %vm104 = vcmp.ge.f32.partialorder %v92, 0.0
  %vm105 = vcmp.ge.f32.partialorder %v95, 0.0
  %vm106 = vcmp.ge.f32.partialorder %v98, 0.0
  %vm107 = vcmp.ge.f32.partialorder %v101, 0.0
  %v108 = vmul.f32 %v89, 0.01
  %v109 = vmul.f32 %v92, 0.01
  %v110 = vmul.f32 %v95, 0.01
  %v111 = vmul.f32 %v98, 0.01
  %v112 = vmul.f32 %v101, 0.01
  %v113 = vsel %vm103, %v89, %v108
  %v114 = vsel %vm104, %v92, %v109
  %v115 = vsel %vm105, %v95, %v110
  %v116 = vsel %vm106, %v98, %v111
  %v117 = vsel %vm107, %v101, %v112
  %v118 = vmul.f32 %v113, %v30
  %v119 = vmul.f32 %v114, %v31
  %v120 = vmul.f32 %v115, %v32
  %v121 = vmul.f32 %v116, %v33
  %v122 = vmul.f32 %v117, %v34
  %123 = vadd.xlane.f32.xlu0 %v118
  %v124 = vpop.xlane.xlu0 %123
  %125 = vadd.xlane.f32.xlu0 %v119
  %v126 = vpop.xlane.xlu0 %125
  %127 = vadd.xlane.f32.xlu0 %v120
  %v128 = vpop.xlane.xlu0 %127
  %129 = vadd.xlane.f32.xlu0 %v121
  %v130 = vpop.xlane.xlu0 %129
  %vm131 = vcmask 1043456
  %v132 = vsel %vm131, %v122, 0.0
  %133 = vadd.xlane.f32.xlu0 %v132
  %v134 = vpop.xlane.xlu0 %133
  %v135 = vmul.f32 %v118, %v113
  %v136 = vmul.f32 %v119, %v114
  %v137 = vmul.f32 %v120, %v115
  %v138 = vmul.f32 %v121, %v116
  %v139 = vmul.f32 %v122, %v117
  %140 = vadd.xlane.f32.xlu0 %v135
  %v141 = vpop.xlane.xlu0 %140
  %142 = vadd.xlane.f32.xlu0 %v136
  %v143 = vpop.xlane.xlu0 %142
  %144 = vadd.xlane.f32.xlu0 %v137
  %v145 = vpop.xlane.xlu0 %144
  %146 = vadd.xlane.f32.xlu0 %v138
  %v147 = vpop.xlane.xlu0 %146
  %v148 = vsel %vm131, %v139, 0.0
  %149 = vadd.xlane.f32.xlu0 %v148
  %v150 = vpop.xlane.xlu0 %149
  %v151 = vld [vmem:[%s4] sm:$0xf]
  %vm152 = vcmask 7168
  %v153 = vsel %vm152, %v124, %v141
  %v154 = vsel %vm152, %v126, %v143
  %v155 = vsel %vm152, %v128, %v145
  %v156 = vsel %vm152, %v130, %v147
  %v157 = vsel %vm152, %v134, %v150
  %vm158 = vcmask 293888
  %v160 = vsel %vm158, %v151, 0
  %v163 = vsel %vm131, %v157, 0
  %165 = vmatpush.msra.mxu0 0.0
  %166 = vmatpush.msra.mxu0 0.0
  %167 = vmatpush.msra.mxu0 0.0
  %168 = vmatpush.msra.mxu0 0.0
  %169 = vmatpush.msra.mxu0 0.0
  %170 = vmatpush.msra.mxu0 0.0
  %171 = vmatpush.msra.mxu0 0.0
  %172 = vmatpush.msra.mxu0 0.0
  %173 = vmatpush.msra.mxu0 0.0
  %174 = vmatpush.msra.mxu0 0.0
  %175 = vmatpush.msra.mxu0 0.0
  %176 = vmatpush.msra.mxu0 %v163
  %177 = vmatpush.msra.mxu0 %v156
  %178 = vmatpush.msra.mxu0 %v155
  %179 = vmatpush.msra.mxu0 %v154
  %180 = vmatpush.msra.mxu0 %v153
  %181 = vmatmul.f32.gmra.mxu0 %v160
  %v182 = vpop.f32.mrf.mxu0
  %v183 = vadd.f32 0.0, %v182
  %184 = vdwg.mxu0
  %v185 = vmul.f32 %v183, %v183
  %187 = vrot.lane.b32.xlu0 %v185, 1
  %v188 = vpop.permute.xlu0 %187
  %v190 = vsub.f32 %v183, %v188
  %v191 = vadd.f32 %v190, 1e-05
  %v192 = vrsqrt.pop %v191
  %v193 = vmul.f32 %v192, %v191
  %v194 = vmul.f32 %v193, %v192
  %v195 = vmul.f32 0.5, %v194
  %v196 = vsub.f32 1.5, %v195
  %v197 = vmul.f32 %v192, %v196
  %vm198 = vweird.f32 %v191
  %vm199 = vweird.f32 %v192
  %vm200 = vmor %vm198, %vm199
  %v201 = vsel %vm200, %v192, %v197
  %v202 = vmul.f32 %v29, %v201
  %204 = vrot.lane.b32.xlu0 %v202, 127
  %v205 = vpop.permute.xlu0 %204
  %v207 = vmul.f32 %v183, %v205
  %209 = vrot.lane.b32.xlu0 %v207, 2
  %v210 = vpop.permute.xlu0 %209
  %v212 = vsub.f32 %v29, %v210
  %v213 = vld [vmem:[%s5] sm:$0xf]
  %214 = vset.pattern.permute.xlu0 1
  %215 = vperm.xlu0 %214, %v202
  %v216 = vpop.permute.xlu0 %215
  %v218 = vmul.f32 %v216, %v213
  %vm219 = vcmask 289792
  %v220 = vsel %vm219, %v218, 0.0
  %v221 = vrot.slane %v220, 4
  %v222 = vadd.f32 %v220, %v221
  %v223 = vrot.slane %v222, 2
  %v224 = vadd.f32 %v222, %v223
  %v225 = vrot.slane %v224, 1
  %v226 = vadd.f32 %v224, %v225
  %228 = vset.pattern.permute.xlu0 2
  %229 = vperm.xlu0 %228, %v212
  %v230 = vpop.permute.xlu0 %229
  %v232 = vmul.f32 %v230, %v213
  %v233 = vsel %vm219, %v232, 0.0
  %v234 = vrot.slane %v233, 4
  %v235 = vadd.f32 %v233, %v234
  %v236 = vrot.slane %v235, 2
  %v237 = vadd.f32 %v235, %v236
  %v238 = vrot.slane %v237, 1
  %v239 = vadd.f32 %v237, %v238
  %v240 = vld [vmem:[%s3] sm:$0xf]
  %v241 = vmul.f32 %v240, %v226
  %v242 = vmul.f32 %v240, %v239
  %v243 = vld [vmem:[%s6] sm:$0xff]
  %v244 = vld [vmem:[%s6 + $0x8] sm:$0xff]
  %v245 = vld [vmem:[%s6 + $0x10] sm:$0xff]
  %v246 = vld [vmem:[%s6 + $0x18] sm:$0xff]
  %v247 = vld [vmem:[%s6 + $0x20] sm:$0xf]
  %v249 = vsel %vm158, %v242, 0
  %v252 = vsel %vm131, %v247, 0
  %254 = vmatpush.msra.mxu0 0.0
  %255 = vmatpush.msra.mxu0 0.0
  %256 = vmatpush.msra.mxu0 0.0
  %257 = vmatpush.msra.mxu0 0.0
  %258 = vmatpush.msra.mxu0 0.0
  %259 = vmatpush.msra.mxu0 0.0
  %260 = vmatpush.msra.mxu0 0.0
  %261 = vmatpush.msra.mxu0 0.0
  %262 = vmatpush.msra.mxu0 0.0
  %263 = vmatpush.msra.mxu0 0.0
  %264 = vmatpush.msra.mxu0 0.0
  %265 = vmatpush.msra.mxu0 %v252
  %266 = vmatpush.msra.mxu0 %v246
  %267 = vmatpush.msra.mxu0 %v245
  %268 = vmatpush.msra.mxu0 %v244
  %269 = vmatpush.msra.mxu0 %v243
  %270 = vmatmul.f32.gmra.mxu0 %v249
  %v271 = vpop.f32.mrf.mxu0
  %v272 = vadd.f32 0.0, %v271
  %273 = vdwg.mxu0
  %v275 = vsel %vm158, %v272, 0
  %v278 = vsel %vm131, %v34, 0
  %280 = vmatpush.msra.mxu0 0.0
  %281 = vmatpush.msra.mxu0 0.0
  %282 = vmatpush.msra.mxu0 0.0
  %283 = vmatpush.msra.mxu0 0.0
  %284 = vmatpush.msra.mxu0 0.0
  %285 = vmatpush.msra.mxu0 0.0
  %286 = vmatpush.msra.mxu0 0.0
  %287 = vmatpush.msra.mxu0 0.0
  %288 = vmatpush.msra.mxu0 0.0
  %289 = vmatpush.msra.mxu0 0.0
  %290 = vmatpush.msra.mxu0 0.0
  %291 = vmatpush.msra.mxu0 %v278
  %292 = vmatpush.msra.mxu0 %v33
  %293 = vmatpush.msra.mxu0 %v32
  %294 = vmatpush.msra.mxu0 %v31
  %295 = vmatpush.msra.mxu0 %v30
  %296 = vmatmul.f32.gmra.mxu0 %v275
  %v297 = vpop.f32.mrf.mxu0
  %v298 = vadd.f32 0.0, %v297
  %299 = vdwg.mxu0
  %v301 = vsel %vm158, %v241, 0
  %v304 = vsel %vm131, %v122, 0
  %306 = vmatpush.msra.mxu0 0.0
  %307 = vmatpush.msra.mxu0 0.0
  %308 = vmatpush.msra.mxu0 0.0
  %309 = vmatpush.msra.mxu0 0.0
  %310 = vmatpush.msra.mxu0 0.0
  %311 = vmatpush.msra.mxu0 0.0
  %312 = vmatpush.msra.mxu0 0.0
  %313 = vmatpush.msra.mxu0 0.0
  %314 = vmatpush.msra.mxu0 0.0
  %315 = vmatpush.msra.mxu0 0.0
  %316 = vmatpush.msra.mxu0 0.0
  %317 = vmatpush.msra.mxu0 %v304
  %318 = vmatpush.msra.mxu0 %v121
  %319 = vmatpush.msra.mxu0 %v120
  %320 = vmatpush.msra.mxu0 %v119
  %321 = vmatpush.msra.mxu0 %v118
  %322 = vmatmul.f32.gmra.mxu0 %v301
  %v323 = vpop.f32.mrf.mxu0
  %v324 = vadd.f32 %v298, %v323
  %325 = vdwg.mxu0
  %327 = vset.pattern.permute.xlu0 0
  %328 = vperm.xlu0 %327, %v29
  %v329 = vpop.permute.xlu0 %328
  %v331 = vadd.f32 %v324, %v329
  %vm332 = vcmp.ge.f32.partialorder %v331, 0.0
  %v333 = vmul.f32 %v331, 0.01
  %v334 = vsel %vm332, %v331, %v333
  %v335 = vperm.slane %v32, 0
  %v336 = vmul.f32 %v334, %v335
  %v337 = vsel %vm131, %v336, 0.0
  %338 = vadd.xlane.f32.xlu0 %v337
  %v339 = vpop.xlane.xlu0 %338
  %v340 = vmul.f32 %v339, 0.010204081
  %v341 = vmul.f32 %v336, %v336
  %v342 = vsel %vm131, %v341, 0.0
  %343 = vadd.xlane.f32.xlu0 %v342
  %v344 = vpop.xlane.xlu0 %343
  %v345 = vmul.f32 %v344, 0.010204081
  %v346 = vmul.f32 %v340, %v340
  %v347 = vsub.f32 %v345, %v346
  %v348 = vadd.f32 %v347, 1e-05
  %v349 = vrsqrt.pop %v348
  %v350 = vmul.f32 %v349, %v348
  %v351 = vmul.f32 %v350, %v349
  %v352 = vmul.f32 0.5, %v351
  %v353 = vsub.f32 1.5, %v352
  %v354 = vmul.f32 %v349, %v353
  %vm355 = vweird.f32 %v348
  %vm356 = vweird.f32 %v349
  %vm357 = vmor %vm355, %vm356
  %v358 = vsel %vm357, %v349, %v354
  %v359 = vmul.f32 %v29, %v358
  %361 = vset.pattern.permute.xlu0 1
  %362 = vperm.xlu0 %361, %v359
  %v363 = vpop.permute.xlu0 %362
  %v365 = vmul.f32 %v336, %v363
  %v366 = vmul.f32 %v340, %v359
  %368 = vrot.lane.b32.xlu0 %v366, 1
  %v369 = vpop.permute.xlu0 %368
  %v371 = vsub.f32 %v29, %v369
  %373 = vset.pattern.permute.xlu0 2
  %374 = vperm.xlu0 %373, %v371
  %v375 = vpop.permute.xlu0 %374
  %v377 = vadd.f32 %v365, %v375
  %378 = vst [vmem:[%s8] sm:$0xf] %v377
  // Predicated region
  $region34: #{net_arch_forward.1} parent=0 // pred_check
    _
  $region35: #{net_arch_forward.1} parent=0 // pred_check_branch
    %380 = sbr.rel (0) target = $region37
  $region36: #{net_arch_forward.1} parent=0 // pred_region
    _
  $region37: #{net_arch_forward.1} parent=0 // pred_fallthru
    _
  // Predicated region
  $region38: #{net_arch_forward.1} parent=0 // pred_check
    _
  $region39: #{net_arch_forward.1} parent=0 // pred_check_branch
    %382 = sbr.rel (0) target = $region41
  $region40: #{net_arch_forward.1} parent=0 // pred_region
    _
  $region41: #{net_arch_forward.1} parent=0 // pred_fallthru
    _

</llo_original>
